<compile_context>
chip_gen: v6e
topology: v6e:2x2x1
jax: 0.10.0
libtpu: 0.0.40
codegen_flags: <defaults>
</compile_context>

<pallas_src>
from functools import partial

import jax
import jax.numpy as jnp
from jax.experimental import pallas as pl
from jax.experimental.pallas import tpu as pltpu

# problem sizes (output_size=V vocab, embed E, hidden H, src_len S, layers L)
B, S, E, H, V, L = 2, 8, 16, 32, 64, 2
VPAD = 128           # lane-dense padded vocab dim for fc_out
GW = 4 * H           # fused gate width (r|z|n_x|n_h) = 128 lanes

# row offsets inside the packed "wide" (128-lane) buffer
EMB_GATE_OFF = 0
EMB_FC_OFF = EMB_GATE_OFF + V
W0_OFF = EMB_FC_OFF + V
W1_OFF = W0_OFF + 2 * H
WFC_OFF = W1_OFF + 2 * H
B0_OFF = WFC_OFF + 2 * H
B1_OFF = B0_OFF + 1
BFC_OFF = B1_OFF + 1

# row offsets inside the packed attention (32-lane) buffer
AT_WH_OFF = 0
AT_WE_OFF = H
AT_B_OFF = 2 * H
AT_V_OFF = 2 * H + 1


def attention_decoder_kernel(
    tok_ref,      # SMEM  [B] int32 token ids
    hid_ref,      # VMEM  [L, B, H]   (aliased with newhid output)
    enc_ref,      # VMEM  [B*S, H]    flattened encoder outputs
    wide_ref,     # VMEM  [323, 128]  emb-folded tables, fused gate/fc weights, biases
    attn_ref,     # VMEM  [66, 32]    W_attn_h^T, W_attn_e^T, b_attn, v
    pred_ref,     # VMEM  [B, VPAD]   out: prediction (lane padded)
    newhid_ref,   # VMEM  [L, B, H]   out: new hidden (aliased with hid input)
    a_ref,        # VMEM  [B, S]      out: attention weights
):
    def dot(x, w):
        return jnp.dot(x, w, preferred_element_type=jnp.float32)

    def wide_row(i):  # static single-row view of the wide buffer
        return wide_ref[pl.ds(i, 1), :]

    # hidden loaded into locals up-front; aliased stores stay last in the kernel.
    h0 = hid_ref[0]                                         # [B, H]
    h1 = hid_ref[1]                                         # [B, H]  == hidden[-1]

    # ---------- embedding folded through weights: one gathered row per table ----------
    # (nn.Dropout on the embedding is eval-mode identity.)
    emb_gate = jnp.concatenate(
        [wide_ref[pl.ds(EMB_GATE_OFF + tok_ref[b], 1), :] for b in range(B)], axis=0)  # [B, GW]
    emb_fc = jnp.concatenate(
        [wide_ref[pl.ds(EMB_FC_OFF + tok_ref[b], 1), :] for b in range(B)], axis=0)    # [B, VPAD]

    enc_flat = enc_ref[...]                                 # [B*S, H]
    enc = enc_flat.reshape(B, S, H)                         # [B, S, H]

    # ---------- Attention: softmax_s( v . tanh(W_attn [h ; enc] + b) ) ----------
    w_ah = attn_ref[pl.ds(AT_WH_OFF, H), :]
    w_ae = attn_ref[pl.ds(AT_WE_OFF, H), :]
    b_a = attn_ref[pl.ds(AT_B_OFF, 1), :]
    v_a = attn_ref[pl.ds(AT_V_OFF, 1), :]
    part_h = dot(h1, w_ah) + b_a                            # bias folded before broadcast
    part_e = dot(enc_flat, w_ae)                            # single flat [B*S,H] matmul
    energy = jnp.tanh(part_e.reshape(B, S, H) + part_h[:, None, :])
    scores = jnp.sum(energy * v_a[None], axis=-1)           # [B, S]
    m = jnp.max(scores, axis=-1, keepdims=True)
    p = jnp.exp(scores - m)
    a = p / jnp.sum(p, axis=-1, keepdims=True)              # [B, S]
    a_ref[...] = a

    # ---------- weighted context: VPU multiply + sublane reduce (no M=1 bmm) ----------
    weighted = jnp.sum(a[:, :, None] * enc, axis=1)         # [B, H]

    # ---------- GRU layer 0: ONE fused [B,2H] @ [2H,4H] matmul ----------
    # cols 0:H = r, H:2H = z, 2H:3H = W_in.x (+b_in), 3H:4H = W_hn.h (+b_hn)
    W0 = wide_ref[pl.ds(W0_OFF, 2 * H), :]
    g0 = dot(jnp.concatenate([weighted, h0], axis=1), W0) + emb_gate + wide_row(B0_OFF)
    r0 = jax.nn.sigmoid(g0[:, 0:H])
    z0 = jax.nn.sigmoid(g0[:, H:2 * H])
    n0 = jnp.tanh(g0[:, 2 * H:3 * H] + r0 * g0[:, 3 * H:4 * H])
    h0_new = (1.0 - z0) * n0 + z0 * h0

    # ---------- GRU layer 1 (inter-layer dropout = eval identity) ----------
    W1 = wide_ref[pl.ds(W1_OFF, 2 * H), :]
    g1 = dot(jnp.concatenate([h0_new, h1], axis=1), W1) + wide_row(B1_OFF)
    r1 = jax.nn.sigmoid(g1[:, 0:H])
    z1 = jax.nn.sigmoid(g1[:, H:2 * H])
    n1 = jnp.tanh(g1[:, 2 * H:3 * H] + r1 * g1[:, 3 * H:4 * H])
    h1_new = (1.0 - z1) * n1 + z1 * h1

    # ---------- prediction = fc_out([output | weighted | embedded]), ONE fused matmul ----------
    WFC = wide_ref[pl.ds(WFC_OFF, 2 * H), :]
    pred_ref[...] = (dot(jnp.concatenate([h1_new, weighted], axis=1), WFC)
                     + emb_fc + wide_row(BFC_OFF))

    # aliased-hidden writes last (all hid_ref reads happened at the top).
    newhid_ref[0] = h0_new
    newhid_ref[1] = h1_new


def pack_params(p):
    """One-time wrapper-side layout work: fold embedding, fuse/zero-pad gate & fc weights,
    stack everything into two packed VMEM buffers."""
    assert 4 * H == VPAD == GW
    emb = p['embedding']                               # [V, E]
    wa = p['w_attn']                                   # [H, 2H]
    wih0, whh0 = p['w_ih0'], p['w_hh0']                # [3H, E+H], [3H, H]
    wih1, whh1 = p['w_ih1'], p['w_hh1']                # [3H, H],   [3H, H]
    bih0, bhh0 = p['b_ih0'][0], p['b_hh0'][0]
    bih1, bhh1 = p['b_ih1'][0], p['b_hh1'][0]
    wfc, bfc = p['w_fc'], p['b_fc'][0]                 # [V, 2H+E], [V]

    def gate(w, g):                                    # rows of gate g (r=0, z=1, n=2)
        return w[g * H:(g + 1) * H]

    zH = jnp.zeros((H, H), jnp.float32)

    # layer-0 fused gate weight: input rows = [weighted | h0], cols = [r | z | n_x | n_h]
    wi0_w = [gate(wih0, g)[:, E:].T for g in range(3)]          # weighted-part, [H,H]
    wh0 = [gate(whh0, g).T for g in range(3)]
    W0 = jnp.concatenate([
        jnp.concatenate([wi0_w[0], wi0_w[1], wi0_w[2], zH], axis=1),
        jnp.concatenate([wh0[0], wh0[1], zH, wh0[2]], axis=1),
    ], axis=0)                                                  # [2H, 4H]
    bias0 = jnp.concatenate([bih0[:H] + bhh0[:H], bih0[H:2 * H] + bhh0[H:2 * H],
                             bih0[2 * H:], bhh0[2 * H:]])[None, :]          # [1, 4H]

    # layer-1 fused gate weight: input rows = [h0_new | h1]
    wi1 = [gate(wih1, g).T for g in range(3)]
    wh1 = [gate(whh1, g).T for g in range(3)]
    W1 = jnp.concatenate([
        jnp.concatenate([wi1[0], wi1[1], wi1[2], zH], axis=1),
        jnp.concatenate([wh1[0], wh1[1], zH, wh1[2]], axis=1),
    ], axis=0)                                                  # [2H, 4H]
    bias1 = jnp.concatenate([bih1[:H] + bhh1[:H], bih1[H:2 * H] + bhh1[H:2 * H],
                             bih1[2 * H:], bhh1[2 * H:]])[None, :]          # [1, 4H]

    # embedding folded through the layer-0 input gate weights (n_h slab zero)
    wi0_e = [gate(wih0, g)[:, :E] for g in range(3)]            # [H, E]
    emb_gate_tbl = jnp.concatenate(
        [emb @ wi0_e[0].T, emb @ wi0_e[1].T, emb @ wi0_e[2].T,
         jnp.zeros((V, H), jnp.float32)], axis=1)               # [V, 4H]

    def padv(w):                                                # [K, V] -> [K, VPAD]
        return jnp.pad(w, ((0, 0), (0, VPAD - V)))

    # embedding folded through the fc "embedded" slab; fc weights fused for [output|weighted]
    emb_fc_tbl = padv(emb @ wfc[:, 2 * H:].T)                   # [V, VPAD]
    W_fc = jnp.concatenate([padv(wfc[:, :H].T), padv(wfc[:, H:2 * H].T)], axis=0)  # [2H, VPAD]
    b_fc = padv(bfc[None, :])                                   # [1, VPAD]

    wide = jnp.concatenate(
        [emb_gate_tbl, emb_fc_tbl, W0, W1, W_fc, bias0, bias1, b_fc], axis=0)       # [323, 128]

    attn = jnp.concatenate([wa[:, :H].T, wa[:, H:].T, p['b_attn'], p['v']], axis=0)  # [66, 32]

    return {'wide': wide, 'attn': attn}


@partial(jax.jit, donate_argnums=(1,))
def attention_decoder_forward(x_tokens, hidden, encoder_outputs, kp):
    enc_flat = encoder_outputs.reshape(B * S, H)
    vmem = pl.BlockSpec(memory_space=pltpu.MemorySpace.VMEM)
    smem = pl.BlockSpec(memory_space=pltpu.MemorySpace.SMEM)
    out_shape = (
        jax.ShapeDtypeStruct((B, VPAD), jnp.float32),   # prediction (lane-padded)
        jax.ShapeDtypeStruct((L, B, H), jnp.float32),   # new hidden (aliased)
        jax.ShapeDtypeStruct((B, S), jnp.float32),      # attention weights
    )
    pred_pad, new_hidden, a = pl.pallas_call(
        attention_decoder_kernel,
        out_shape=out_shape,
        in_specs=[smem, vmem, vmem, vmem, vmem],
        out_specs=(vmem, vmem, vmem),
        input_output_aliases={1: 1},                    # hidden in -> new hidden out
    )(x_tokens.astype(jnp.int32), hidden, enc_flat, kp['wide'], kp['attn'])
    return pred_pad[:, :V], new_hidden, a


def reference_forward(x_tokens, hidden, enc, params):
    """Pure-JAX reference mirroring the PyTorch forward (eval mode)."""
    emb = params['embedding'][x_tokens]
    last_hidden = jnp.broadcast_to(hidden[-1][:, None, :], (B, S, H))
    cat = jnp.concatenate([last_hidden, enc], axis=2)
    energy = jnp.tanh(cat @ params['w_attn'].T + params['b_attn'][0])
    scores = energy @ params['v'][0]
    a = jax.nn.softmax(scores, axis=1)
    weighted = jnp.einsum('bs,bsh->bh', a, enc)

    def gru(x, h, wih, whh, bih, bhh):
        gi = x @ wih.T + bih[0]
        gh = h @ whh.T + bhh[0]
        r = jax.nn.sigmoid(gi[:, :H] + gh[:, :H])
        z = jax.nn.sigmoid(gi[:, H:2 * H] + gh[:, H:2 * H])
        n = jnp.tanh(gi[:, 2 * H:] + r * gh[:, 2 * H:])
        return (1.0 - z) * n + z * h

    x0 = jnp.concatenate([emb, weighted], axis=1)
    h0n = gru(x0, hidden[0], params['w_ih0'], params['w_hh0'], params['b_ih0'], params['b_hh0'])
    h1n = gru(h0n, hidden[1], params['w_ih1'], params['w_hh1'], params['b_ih1'], params['b_hh1'])
    pred = jnp.concatenate([h1n, weighted, emb], axis=1) @ params['w_fc'].T + params['b_fc'][0]
    return pred, jnp.stack([h0n, h1n]), a


def init_params(key):
    ks = jax.random.split(key, 14)

    def u(k, shape, fan_in):
        bound = 1.0 / float(fan_in) ** 0.5
        return jax.random.uniform(k, shape, jnp.float32, -bound, bound)

    return {
        'embedding': jax.random.normal(ks[0], (V, E), jnp.float32) * 0.1,
        'w_attn': u(ks[1], (H, 2 * H), 2 * H),
        'b_attn': u(ks[2], (1, H), 2 * H),
        'v':      u(ks[3], (1, H), H),
        'w_ih0':  u(ks[4], (3 * H, E + H), H),
        'w_hh0':  u(ks[5], (3 * H, H), H),
        'b_ih0':  u(ks[6], (1, 3 * H), H),
        'b_hh0':  u(ks[7], (1, 3 * H), H),
        'w_ih1':  u(ks[8], (3 * H, H), H),
        'w_hh1':  u(ks[9], (3 * H, H), H),
        'b_ih1':  u(ks[10], (1, 3 * H), H),
        'b_hh1':  u(ks[11], (1, 3 * H), H),
        'w_fc':   u(ks[12], (V, 2 * H + E), 2 * H + E),
        'b_fc':   u(ks[13], (1, V), 2 * H + E),
    }


if __name__ == "__main__":
    key = jax.random.PRNGKey(0)
    kparam, kx, kh, ke = jax.random.split(key, 4)
    params = init_params(kparam)
    packed = pack_params(params)

    x_tokens = jax.random.randint(kx, (B,), 0, V)                       # token ids [B]
    hidden = jax.random.normal(kh, (L, B, H), jnp.float32)              # GRU hidden
    encoder_outputs = jax.random.normal(ke, (B, S, H), jnp.float32)

    # reference first: `hidden` is donated to the kernel call (true in-place update).
    pred_r, hid_r, a_r = reference_forward(x_tokens, hidden, encoder_outputs, params)
    jax.block_until_ready((pred_r, hid_r, a_r))

    pred, new_hidden, a = attention_decoder_forward(x_tokens, hidden, encoder_outputs, packed)
    jax.block_until_ready((pred, new_hidden, a))

    assert pred.shape == (B, V) and new_hidden.shape == (L, B, H) and a.shape == (B, S)
    assert jnp.allclose(pred, pred_r, atol=1e-4, rtol=1e-4)
    assert jnp.allclose(new_hidden, hid_r, atol=1e-4, rtol=1e-4)
    assert jnp.allclose(a, a_r, atol=1e-5, rtol=1e-4)
    print("KERNEL_OK")
</pallas_src>

<mosaic_0001>
module attributes {stable_mosaic.version = 11 : i64} {
  func.func @attention_decoder_kernel(%arg0: memref<2xi32, #tpu.memory_space<smem>>, %arg1: memref<2x2x32xf32, #tpu.memory_space<vmem>>, %arg2: memref<16x32xf32, #tpu.memory_space<vmem>>, %arg3: memref<323x128xf32, #tpu.memory_space<vmem>>, %arg4: memref<66x32xf32, #tpu.memory_space<vmem>>, %arg5: memref<2x128xf32, #tpu.memory_space<vmem>>, %arg6: memref<2x2x32xf32, #tpu.memory_space<vmem>>, %arg7: memref<2x8xf32, #tpu.memory_space<vmem>>) attributes {dimension_semantics = [], scalar_prefetch = 0 : i64, scratch_operands = 0 : i64, tpu.core_type = #tpu.core_type<tc>} {
    %c0 = arith.constant 0 : index
    %c0_0 = arith.constant 0 : index
    %c0_1 = arith.constant 0 : index
    %0 = vector.load %arg1[%c0, %c0_0, %c0_1] : memref<2x2x32xf32, #tpu.memory_space<vmem>>, vector<1x2x32xf32>
    %1 = vector.shape_cast %0 : vector<1x2x32xf32> to vector<2x32xf32>
    %c1 = arith.constant 1 : index
    %c0_2 = arith.constant 0 : index
    %c0_3 = arith.constant 0 : index
    %2 = vector.load %arg1[%c1, %c0_2, %c0_3] : memref<2x2x32xf32, #tpu.memory_space<vmem>>, vector<1x2x32xf32>
    %3 = vector.shape_cast %2 : vector<1x2x32xf32> to vector<2x32xf32>
    %c0_4 = arith.constant 0 : index
    %4 = memref.load %arg0[%c0_4] : memref<2xi32, #tpu.memory_space<smem>>
    %c0_i32 = arith.constant 0 : i32
    %5 = arith.addi %c0_i32, %4 : i32
    %6 = arith.index_cast %5 : i32 to index
    %c0_5 = arith.constant 0 : index
    %7 = vector.load %arg3[%6, %c0_5] : memref<323x128xf32, #tpu.memory_space<vmem>>, vector<1x128xf32>
    %c1_6 = arith.constant 1 : index
    %8 = memref.load %arg0[%c1_6] : memref<2xi32, #tpu.memory_space<smem>>
    %c0_i32_7 = arith.constant 0 : i32
    %9 = arith.addi %c0_i32_7, %8 : i32
    %10 = arith.index_cast %9 : i32 to index
    %c0_8 = arith.constant 0 : index
    %11 = vector.load %arg3[%10, %c0_8] : memref<323x128xf32, #tpu.memory_space<vmem>>, vector<1x128xf32>
    %12 = tpu.concatenate %7, %11 in 0 : vector<1x128xf32>, vector<1x128xf32> -> vector<2x128xf32>
    %c0_9 = arith.constant 0 : index
    %13 = memref.load %arg0[%c0_9] : memref<2xi32, #tpu.memory_space<smem>>
    %c64_i32 = arith.constant 64 : i32
    %14 = arith.addi %c64_i32, %13 : i32
    %15 = arith.index_cast %14 : i32 to index
    %c0_10 = arith.constant 0 : index
    %16 = vector.load %arg3[%15, %c0_10] : memref<323x128xf32, #tpu.memory_space<vmem>>, vector<1x128xf32>
    %c1_11 = arith.constant 1 : index
    %17 = memref.load %arg0[%c1_11] : memref<2xi32, #tpu.memory_space<smem>>
    %c64_i32_12 = arith.constant 64 : i32
    %18 = arith.addi %c64_i32_12, %17 : i32
    %19 = arith.index_cast %18 : i32 to index
    %c0_13 = arith.constant 0 : index
    %20 = vector.load %arg3[%19, %c0_13] : memref<323x128xf32, #tpu.memory_space<vmem>>, vector<1x128xf32>
    %21 = tpu.concatenate %16, %20 in 0 : vector<1x128xf32>, vector<1x128xf32> -> vector<2x128xf32>
    %c0_14 = arith.constant 0 : index
    %c0_15 = arith.constant 0 : index
    %22 = vector.load %arg2[%c0_14, %c0_15] : memref<16x32xf32, #tpu.memory_space<vmem>>, vector<16x32xf32>
    %23 = vector.shape_cast %22 : vector<16x32xf32> to vector<2x8x32xf32>
    %c0_16 = arith.constant 0 : index
    %c0_17 = arith.constant 0 : index
    %24 = vector.load %arg4[%c0_16, %c0_17] : memref<66x32xf32, #tpu.memory_space<vmem>>, vector<32x32xf32>
    %c32 = arith.constant 32 : index
    %c0_18 = arith.constant 0 : index
    %25 = vector.load %arg4[%c32, %c0_18] : memref<66x32xf32, #tpu.memory_space<vmem>>, vector<32x32xf32>
    %c64 = arith.constant 64 : index
    %c0_19 = arith.constant 0 : index
    %26 = vector.load %arg4[%c64, %c0_19] : memref<66x32xf32, #tpu.memory_space<vmem>>, vector<1x32xf32>
    %c65 = arith.constant 65 : index
    %c0_20 = arith.constant 0 : index
    %27 = vector.load %arg4[%c65, %c0_20] : memref<66x32xf32, #tpu.memory_space<vmem>>, vector<1x32xf32>
    %cst = arith.constant dense<0.000000e+00> : vector<2x32xf32>
    %28 = tpu.matmul %3, %24, %cst {dimension_numbers = #tpu.dot_dimension_numbers<[1], [0], [0], [1], [0, 0, 1, 1], [], []>} : vector<2x32xf32>, vector<32x32xf32>, vector<2x32xf32> -> vector<2x32xf32>
    %29 = vector.broadcast %26 : vector<1x32xf32> to vector<2x32xf32>
    %30 = arith.addf %28, %29 : vector<2x32xf32>
    %cst_21 = arith.constant dense<0.000000e+00> : vector<16x32xf32>
    %31 = tpu.matmul %22, %25, %cst_21 {dimension_numbers = #tpu.dot_dimension_numbers<[1], [0], [0], [1], [0, 0, 1, 1], [], []>} : vector<16x32xf32>, vector<32x32xf32>, vector<16x32xf32> -> vector<16x32xf32>
    %32 = vector.shape_cast %31 : vector<16x32xf32> to vector<2x8x32xf32>
    %33 = vector.shape_cast %30 : vector<2x32xf32> to vector<2x1x32xf32>
    %34 = vector.broadcast %33 : vector<2x1x32xf32> to vector<2x8x32xf32>
    %35 = arith.addf %32, %34 : vector<2x8x32xf32>
    %36 = math.tanh %35 : vector<2x8x32xf32>
    %37 = vector.shape_cast %27 : vector<1x32xf32> to vector<1x1x32xf32>
    %38 = vector.broadcast %37 : vector<1x1x32xf32> to vector<2x8x32xf32>
    %39 = arith.mulf %36, %38 : vector<2x8x32xf32>
    %cst_22 = arith.constant dense<0.000000e+00> : vector<2x8xf32>
    %40 = vector.multi_reduction <add>, %39, %cst_22 [2] : vector<2x8x32xf32> to vector<2x8xf32>
    %cst_23 = arith.constant dense<0xFF800000> : vector<2xf32>
    %41 = vector.multi_reduction <maximumf>, %40, %cst_23 [1] : vector<2x8xf32> to vector<2xf32>
    %42 = vector.shape_cast %41 : vector<2xf32> to vector<2x1xf32>
    %43 = vector.broadcast %42 : vector<2x1xf32> to vector<2x8xf32>
    %44 = arith.subf %40, %43 : vector<2x8xf32>
    %45 = math.exp %44 : vector<2x8xf32>
    %cst_24 = arith.constant dense<0.000000e+00> : vector<2xf32>
    %46 = vector.multi_reduction <add>, %45, %cst_24 [1] : vector<2x8xf32> to vector<2xf32>
    %47 = vector.shape_cast %46 : vector<2xf32> to vector<2x1xf32>
    %48 = vector.broadcast %47 : vector<2x1xf32> to vector<2x8xf32>
    %49 = arith.divf %45, %48 : vector<2x8xf32>
    %c0_25 = arith.constant 0 : index
    %c0_26 = arith.constant 0 : index
    %50 = vector.load %arg7[%c0_25, %c0_26] : memref<2x8xf32, #tpu.memory_space<vmem>>, vector<2x8xf32>
    tpu.vector_store %arg7[%c0_25, %c0_26], %49 {strides = array<i32>} : memref<2x8xf32, #tpu.memory_space<vmem>>, vector<2x8xf32>,
    %51 = vector.shape_cast %49 : vector<2x8xf32> to vector<2x8x1xf32>
    %52 = vector.broadcast %51 : vector<2x8x1xf32> to vector<2x8x32xf32>
    %53 = arith.mulf %52, %23 : vector<2x8x32xf32>
    %cst_27 = arith.constant dense<0.000000e+00> : vector<2x32xf32>
    %54 = vector.multi_reduction <add>, %53, %cst_27 [1] : vector<2x8x32xf32> to vector<2x32xf32>
    %c128 = arith.constant 128 : index
    %c0_28 = arith.constant 0 : index
    %55 = vector.load %arg3[%c128, %c0_28] : memref<323x128xf32, #tpu.memory_space<vmem>>, vector<64x128xf32>
    %56 = tpu.concatenate %54, %1 in 1 : vector<2x32xf32>, vector<2x32xf32> -> vector<2x64xf32>
    %cst_29 = arith.constant dense<0.000000e+00> : vector<2x128xf32>
    %57 = tpu.matmul %56, %55, %cst_29 {dimension_numbers = #tpu.dot_dimension_numbers<[1], [0], [0], [1], [0, 0, 1, 1], [], []>} : vector<2x64xf32>, vector<64x128xf32>, vector<2x128xf32> -> vector<2x128xf32>
    %58 = arith.addf %57, %12 : vector<2x128xf32>
    %c320 = arith.constant 320 : index
    %c0_30 = arith.constant 0 : index
    %59 = vector.load %arg3[%c320, %c0_30] : memref<323x128xf32, #tpu.memory_space<vmem>>, vector<1x128xf32>
    %60 = vector.broadcast %59 : vector<1x128xf32> to vector<2x128xf32>
    %61 = arith.addf %58, %60 : vector<2x128xf32>
    %62 = vector.extract_strided_slice %61 {offsets = [0, 0], sizes = [2, 32], strides = [1, 1]} : vector<2x128xf32> to vector<2x32xf32>
    %63 = arith.negf %62 : vector<2x32xf32>
    %64 = math.exp %63 : vector<2x32xf32>
    %cst_31 = arith.constant 1.000000e+00 : f32
    %65 = vector.broadcast %cst_31 : f32 to vector<2x32xf32>
    %66 = arith.addf %65, %64 : vector<2x32xf32>
    %67 = arith.divf %65, %66 : vector<2x32xf32>
    %68 = vector.extract_strided_slice %61 {offsets = [0, 32], sizes = [2, 32], strides = [1, 1]} : vector<2x128xf32> to vector<2x32xf32>
    %69 = arith.negf %68 : vector<2x32xf32>
    %70 = math.exp %69 : vector<2x32xf32>
    %cst_32 = arith.constant 1.000000e+00 : f32
    %71 = vector.broadcast %cst_32 : f32 to vector<2x32xf32>
    %72 = arith.addf %71, %70 : vector<2x32xf32>
    %73 = arith.divf %71, %72 : vector<2x32xf32>
    %74 = vector.extract_strided_slice %61 {offsets = [0, 64], sizes = [2, 32], strides = [1, 1]} : vector<2x128xf32> to vector<2x32xf32>
    %75 = vector.extract_strided_slice %61 {offsets = [0, 96], sizes = [2, 32], strides = [1, 1]} : vector<2x128xf32> to vector<2x32xf32>
    %76 = arith.mulf %67, %75 : vector<2x32xf32>
    %77 = arith.addf %74, %76 : vector<2x32xf32>
    %78 = math.tanh %77 : vector<2x32xf32>
    %cst_33 = arith.constant 1.000000e+00 : f32
    %79 = vector.broadcast %cst_33 : f32 to vector<2x32xf32>
    %80 = arith.subf %79, %73 : vector<2x32xf32>
    %81 = arith.mulf %80, %78 : vector<2x32xf32>
    %82 = arith.mulf %73, %1 : vector<2x32xf32>
    %83 = arith.addf %81, %82 : vector<2x32xf32>
    %c192 = arith.constant 192 : index
    %c0_34 = arith.constant 0 : index
    %84 = vector.load %arg3[%c192, %c0_34] : memref<323x128xf32, #tpu.memory_space<vmem>>, vector<64x128xf32>
    %85 = tpu.concatenate %83, %3 in 1 : vector<2x32xf32>, vector<2x32xf32> -> vector<2x64xf32>
    %cst_35 = arith.constant dense<0.000000e+00> : vector<2x128xf32>
    %86 = tpu.matmul %85, %84, %cst_35 {dimension_numbers = #tpu.dot_dimension_numbers<[1], [0], [0], [1], [0, 0, 1, 1], [], []>} : vector<2x64xf32>, vector<64x128xf32>, vector<2x128xf32> -> vector<2x128xf32>
    %c321 = arith.constant 321 : index
    %c0_36 = arith.constant 0 : index
    %87 = vector.load %arg3[%c321, %c0_36] : memref<323x128xf32, #tpu.memory_space<vmem>>, vector<1x128xf32>
    %88 = vector.broadcast %87 : vector<1x128xf32> to vector<2x128xf32>
    %89 = arith.addf %86, %88 : vector<2x128xf32>
    %90 = vector.extract_strided_slice %89 {offsets = [0, 0], sizes = [2, 32], strides = [1, 1]} : vector<2x128xf32> to vector<2x32xf32>
    %91 = arith.negf %90 : vector<2x32xf32>
    %92 = math.exp %91 : vector<2x32xf32>
    %cst_37 = arith.constant 1.000000e+00 : f32
    %93 = vector.broadcast %cst_37 : f32 to vector<2x32xf32>
    %94 = arith.addf %93, %92 : vector<2x32xf32>
    %95 = arith.divf %93, %94 : vector<2x32xf32>
    %96 = vector.extract_strided_slice %89 {offsets = [0, 32], sizes = [2, 32], strides = [1, 1]} : vector<2x128xf32> to vector<2x32xf32>
    %97 = arith.negf %96 : vector<2x32xf32>
    %98 = math.exp %97 : vector<2x32xf32>
    %cst_38 = arith.constant 1.000000e+00 : f32
    %99 = vector.broadcast %cst_38 : f32 to vector<2x32xf32>
    %100 = arith.addf %99, %98 : vector<2x32xf32>
    %101 = arith.divf %99, %100 : vector<2x32xf32>
    %102 = vector.extract_strided_slice %89 {offsets = [0, 64], sizes = [2, 32], strides = [1, 1]} : vector<2x128xf32> to vector<2x32xf32>
    %103 = vector.extract_strided_slice %89 {offsets = [0, 96], sizes = [2, 32], strides = [1, 1]} : vector<2x128xf32> to vector<2x32xf32>
    %104 = arith.mulf %95, %103 : vector<2x32xf32>
    %105 = arith.addf %102, %104 : vector<2x32xf32>
    %106 = math.tanh %105 : vector<2x32xf32>
    %cst_39 = arith.constant 1.000000e+00 : f32
    %107 = vector.broadcast %cst_39 : f32 to vector<2x32xf32>
    %108 = arith.subf %107, %101 : vector<2x32xf32>
    %109 = arith.mulf %108, %106 : vector<2x32xf32>
    %110 = arith.mulf %101, %3 : vector<2x32xf32>
    %111 = arith.addf %109, %110 : vector<2x32xf32>
    %c256 = arith.constant 256 : index
    %c0_40 = arith.constant 0 : index
    %112 = vector.load %arg3[%c256, %c0_40] : memref<323x128xf32, #tpu.memory_space<vmem>>, vector<64x128xf32>
    %113 = tpu.concatenate %111, %54 in 1 : vector<2x32xf32>, vector<2x32xf32> -> vector<2x64xf32>
    %cst_41 = arith.constant dense<0.000000e+00> : vector<2x128xf32>
    %114 = tpu.matmul %113, %112, %cst_41 {dimension_numbers = #tpu.dot_dimension_numbers<[1], [0], [0], [1], [0, 0, 1, 1], [], []>} : vector<2x64xf32>, vector<64x128xf32>, vector<2x128xf32> -> vector<2x128xf32>
    %115 = arith.addf %114, %21 : vector<2x128xf32>
    %c322 = arith.constant 322 : index
    %c0_42 = arith.constant 0 : index
    %116 = vector.load %arg3[%c322, %c0_42] : memref<323x128xf32, #tpu.memory_space<vmem>>, vector<1x128xf32>
    %117 = vector.broadcast %116 : vector<1x128xf32> to vector<2x128xf32>
    %118 = arith.addf %115, %117 : vector<2x128xf32>
    %c0_43 = arith.constant 0 : index
    %c0_44 = arith.constant 0 : index
    %119 = vector.load %arg5[%c0_43, %c0_44] : memref<2x128xf32, #tpu.memory_space<vmem>>, vector<2x128xf32>
    tpu.vector_store %arg5[%c0_43, %c0_44], %118 {strides = array<i32>} : memref<2x128xf32, #tpu.memory_space<vmem>>, vector<2x128xf32>,
    %c0_45 = arith.constant 0 : index
    %c0_46 = arith.constant 0 : index
    %c0_47 = arith.constant 0 : index
    %120 = vector.load %arg6[%c0_45, %c0_46, %c0_47] : memref<2x2x32xf32, #tpu.memory_space<vmem>>, vector<1x2x32xf32>
    %121 = vector.shape_cast %120 : vector<1x2x32xf32> to vector<2x32xf32>
    %122 = vector.shape_cast %83 : vector<2x32xf32> to vector<1x2x32xf32>
    tpu.vector_store %arg6[%c0_45, %c0_46, %c0_47], %122 {strides = array<i32>} : memref<2x2x32xf32, #tpu.memory_space<vmem>>, vector<1x2x32xf32>,
    %c1_48 = arith.constant 1 : index
    %c0_49 = arith.constant 0 : index
    %c0_50 = arith.constant 0 : index
    %123 = vector.load %arg6[%c1_48, %c0_49, %c0_50] : memref<2x2x32xf32, #tpu.memory_space<vmem>>, vector<1x2x32xf32>
    %124 = vector.shape_cast %123 : vector<1x2x32xf32> to vector<2x32xf32>
    %125 = vector.shape_cast %111 : vector<2x32xf32> to vector<1x2x32xf32>
    tpu.vector_store %arg6[%c1_48, %c0_49, %c0_50], %125 {strides = array<i32>} : memref<2x2x32xf32, #tpu.memory_space<vmem>>, vector<1x2x32xf32>,
    return
  }
}

</mosaic_0001>

<llo_original>
// kernel: attention_decoder_forward.1
$region0: #{attention_decoder_forward.1}
  #allocation0 [shape = 'u32[]', space=smem, size = 0x4, offset = 0x4, fixed_abs, tag = 'smem constant byte address 0x4 - core index']
  #allocation1 [shape = 'u32[144,128]{1,0:T(1,128)}', space=vmem, size = 0x12000, scoped, tag = 'internal scratch']
  %s0 = inlined_call_operand.vmem [shape: s32[2], index: 0, kind: input, shape index: {}]
  %s1 = inlined_call_operand.vmem [shape: f32[2,2,32], index: 1, kind: input, shape index: {}, may-alias: {1,6}]
  %s2 = inlined_call_operand.vmem [shape: f32[16,32], index: 2, kind: input, shape index: {}]
  %s3 = inlined_call_operand.hbm [shape: f32[323,128], index: 3, kind: input, shape index: {}]
  %s4 = inlined_call_operand.vmem [shape: f32[66,32], index: 4, kind: input, shape index: {}]
  %s5 = inlined_call_operand.hbm [shape: f32[2,128], index: 5, kind: output, shape index: {0}]
  %s6 = inlined_call_operand.vmem [shape: f32[2,2,32], index: 6, kind: output, shape index: {1}, may-alias: {1,6}]
  %s7 = inlined_call_operand.hbm [shape: f32[2,8], index: 7, kind: output, shape index: {2}]
  %8 = xla_tuple %s5, %s6, %s7
  %s9 = sld [smem:[#allocation0]]
  $region54: #{attention_decoder_forward.1} parent=0
    _
  %s11 = ssub.s32 1, %s9
  %s12 = scalar_select 0, %s11, %s9
  $region1: #{attention_decoder_forward.1} parent=0
    #allocation2 [shape = 'u8[512]{0}', space=smem, size = 0x200, scoped, tag = 'input window, operand 0, single buffered']
    #allocation3 [shape = 's32[1]{0}', space=sflag, size = 0x4, scoped, tag = 'scoped memory for attention_decoder_forward.1']
    #allocation4 [shape = 's32[1]{0}', space=sflag, size = 0x4, scoped, tag = 'scoped memory for attention_decoder_forward.1']
    #allocation5 [shape = 's32[1]{0}', space=sflag, size = 0x4, scoped, tag = 'scoped memory for attention_decoder_forward.1']
    #allocation6 [shape = 'u8[167936]{0}', space=vmem, size = 0x29000, scoped, tag = 'input window, operand 3, single buffered']
    #allocation7 [shape = 'u8[1024]{0}', space=vmem, size = 0x400, scoped, tag = 'output window, operand 0, single buffered']
    #allocation8 [shape = 'u8[1024]{0}', space=vmem, size = 0x400, scoped, tag = 'output window, operand 2, single buffered']
    #allocation9 [shape = 's32[1]{0}', space=sflag, size = 0x4, scoped, tag = 'scoped memory for attention_decoder_forward.1']
    %13 = vsyncpa [#allocation5], 0
    %14 = vsyncpa [#allocation3], 0
    %15 = vsyncpa [#allocation4], 0
    %16 = vsyncpa [#allocation9], 0
    // Predicated region
    $region2: #{attention_decoder_forward.1} parent=1 // pred_check
      _
    $region3: #{attention_decoder_forward.1} parent=1 // pred_check_branch
      %18 = sbr.rel (0) target = $region5
    $region4: #{attention_decoder_forward.1} parent=1 // pred_region
      %s20 = ssub.s32 16, 16
      %21 = vsyncadd [#allocation5], %s20
      %s23 = sshll.u32 %s0, 4
      %s24 = int_to_ptr.vmem [resolvable:$true] %s23
      %26 = dma.vmem_to_smem %s24, 16, [#allocation2], [#allocation5]
    $region5: #{attention_decoder_forward.1} parent=1 // pred_fallthru
      _
    // Predicated region
    $region6: #{attention_decoder_forward.1} parent=1 // pred_check
      _
    $region7: #{attention_decoder_forward.1} parent=1 // pred_check_branch
      %28 = sbr.rel (0) target = $region9
    $region8: #{attention_decoder_forward.1} parent=1 // pred_region
      _
    $region9: #{attention_decoder_forward.1} parent=1 // pred_fallthru
      _
    // Predicated region
    $region10: #{attention_decoder_forward.1} parent=1 // pred_check
      _
    $region11: #{attention_decoder_forward.1} parent=1 // pred_check_branch
      %30 = sbr.rel (0) target = $region13
    $region12: #{attention_decoder_forward.1} parent=1 // pred_region
      _
    $region13: #{attention_decoder_forward.1} parent=1 // pred_fallthru
      _
    // Predicated region
    $region14: #{attention_decoder_forward.1} parent=1 // pred_check
      _
    $region15: #{attention_decoder_forward.1} parent=1 // pred_check_branch
      %32 = sbr.rel (0) target = $region17
    $region16: #{attention_decoder_forward.1} parent=1 // pred_region
      %s34 = ssub.s32 5248, 5248
      %35 = vsyncadd [#allocation3], %s34
      %s36 = sshll.u32 [#allocation6], 4
      %s37 = int_to_ptr.vmem [resolvable:$true] %s36
      %42 = dma.hbm_to_vmem [thread:$0]  %s3, 5248, %s37, [#allocation3], 128, 128, 8
    $region17: #{attention_decoder_forward.1} parent=1 // pred_fallthru
      _
    // Predicated region
    $region18: #{attention_decoder_forward.1} parent=1 // pred_check
      _
    $region19: #{attention_decoder_forward.1} parent=1 // pred_check_branch
      %44 = sbr.rel (0) target = $region21
    $region20: #{attention_decoder_forward.1} parent=1 // pred_region
      _
    $region21: #{attention_decoder_forward.1} parent=1 // pred_fallthru
      _
    // Predicated region
    $region22: #{attention_decoder_forward.1} parent=1 // pred_check
      _
    $region23: #{attention_decoder_forward.1} parent=1 // pred_check_branch
      %46 = sbr.rel (0) target = $region25
    $region24: #{attention_decoder_forward.1} parent=1 // pred_region
      %47 = dma.done [#allocation5], 16
    $region25: #{attention_decoder_forward.1} parent=1 // pred_fallthru
      _
    // Predicated region
    $region26: #{attention_decoder_forward.1} parent=1 // pred_check
      _
    $region27: #{attention_decoder_forward.1} parent=1 // pred_check_branch
      %49 = sbr.rel (0) target = $region29
    $region28: #{attention_decoder_forward.1} parent=1 // pred_region
      %50 = dma.done [#allocation3], 5248
    $region29: #{attention_decoder_forward.1} parent=1 // pred_fallthru
      _
    %51 = sfence
    %v52 = vld [vmem:[%s1] sm:$0x3]
    %s53 = scalar_lea.vmem %s1, 2
    %v54 = vld [vmem:[%s53] sm:$0x3]
    %s55 = sld [smem:[#allocation2]]
    %s56 = scalar_lea.vmem [#allocation6], %s55
    %v57 = vld [vmem:[%s56] sm:$0x1]
    %s58 = sld [smem:[#allocation2 + $0x1]]
    %s59 = scalar_lea.vmem [#allocation6], %s58
    %v60 = vld [vmem:[%s59] sm:$0x1]
    %v62 = vrot.slane %v60, 7
    %vm64 = vcmask 1040384
    %v65 = vsel %vm64, %v57, %v62
    %s66 = sadd.s32 %s55, 64
    %s67 = scalar_lea.vmem [#allocation6], %s66
    %v68 = vld [vmem:[%s67] sm:$0x1]
    %s69 = sadd.s32 %s58, 64
    %s70 = scalar_lea.vmem [#allocation6], %s69
    %v71 = vld [vmem:[%s70] sm:$0x1]
    %v73 = vrot.slane %v71, 7
    %v75 = vsel %vm64, %v68, %v73
    %v76 = vld [vmem:[%s2] sm:$0xff]
    %v77 = vld [vmem:[%s2 + $0x8] sm:$0xff]
    %v78 = vld [vmem:[%s4] sm:$0xff]
    %v79 = vld [vmem:[%s4 + $0x8] sm:$0xff]
    %v80 = vld [vmem:[%s4 + $0x10] sm:$0xff]
    %v81 = vld [vmem:[%s4 + $0x18] sm:$0xff]
    %v82 = vld [vmem:[%s4 + $0x20] sm:$0xff]
    %v83 = vld [vmem:[%s4 + $0x28] sm:$0xff]
    %v84 = vld [vmem:[%s4 + $0x30] sm:$0xff]
    %v85 = vld [vmem:[%s4 + $0x38] sm:$0xff]
    %v86 = vld [vmem:[%s4 + $0x40] sm:$0x1]
    %v87 = vld [vmem:[%s4 + $0x41] sm:$0x1]
    %v88 = vlaneseq
    %v89 = vshrl.u32 %v88, 7
    %v90 = vsub.s32 0, %v89
    %v91 = vrot.slane %v86, %v90
    %vm92 = vcmask 261120
    %v94 = vsel %vm92, %v54, 0
    %96 = vmatprep.subr.mxu0 0.0
    %97 = vmatpush1.msra.mxu0 0.0
    %98 = vmatprep.subr.mxu0 0.0
    %99 = vmatpush1.msra.mxu0 0.0
    %100 = vmatprep.subr.mxu0 0.0
    %101 = vmatpush1.msra.mxu0 0.0
    %102 = vmatprep.subr.mxu0 0.0
    %103 = vmatpush1.msra.mxu0 0.0
    %104 = vmatprep.subr.mxu0 0.0
    %105 = vmatpush1.msra.mxu0 0.0
    %106 = vmatprep.subr.mxu0 0.0
    %107 = vmatpush1.msra.mxu0 0.0
    %108 = vmatprep.subr.mxu0 0.0
    %109 = vmatpush1.msra.mxu0 0.0
    %110 = vmatprep.subr.mxu0 0.0
    %111 = vmatpush1.msra.mxu0 0.0
    %112 = vmatprep.subr.mxu0 0.0
    %113 = vmatpush1.msra.mxu0 0.0
    %114 = vmatprep.subr.mxu0 0.0
    %115 = vmatpush1.msra.mxu0 0.0
    %116 = vmatprep.subr.mxu0 0.0
    %117 = vmatpush1.msra.mxu0 0.0
    %118 = vmatprep.subr.mxu0 0.0
    %119 = vmatpush1.msra.mxu0 0.0
    %120 = vmatprep.subr.mxu0 0.0
    %121 = vmatpush1.msra.mxu0 %v81
    %122 = vmatprep.subr.mxu0 0.0
    %123 = vmatpush1.msra.mxu0 %v80
    %124 = vmatprep.subr.mxu0 0.0
    %125 = vmatpush1.msra.mxu0 %v79
    %126 = vmatprep.subr.mxu0 0.0
    %127 = vmatpush1.msra.mxu0 %v78
    %128 = vmatprep.subr.mxu0 0.0
    %129 = vmatpush2.msra.mxu0 0.0
    %130 = vmatprep.subr.mxu0 0.0
    %131 = vmatpush2.msra.mxu0 0.0
    %132 = vmatprep.subr.mxu0 0.0
    %133 = vmatpush2.msra.mxu0 0.0
    %134 = vmatprep.subr.mxu0 0.0
    %135 = vmatpush2.msra.mxu0 0.0
    %136 = vmatprep.subr.mxu0 0.0
    %137 = vmatpush2.msra.mxu0 0.0
    %138 = vmatprep.subr.mxu0 0.0
    %139 = vmatpush2.msra.mxu0 0.0
    %140 = vmatprep.subr.mxu0 0.0
    %141 = vmatpush2.msra.mxu0 0.0
    %142 = vmatprep.subr.mxu0 0.0
    %143 = vmatpush2.msra.mxu0 0.0
    %144 = vmatprep.subr.mxu0 0.0
    %145 = vmatpush2.msra.mxu0 0.0
    %146 = vmatprep.subr.mxu0 0.0
    %147 = vmatpush2.msra.mxu0 0.0
    %148 = vmatprep.subr.mxu0 0.0
    %149 = vmatpush2.msra.mxu0 0.0
    %150 = vmatprep.subr.mxu0 0.0
    %151 = vmatpush2.msra.mxu0 0.0
    %152 = vmatprep.subr.mxu0 0.0
    %153 = vmatpush2.msra.mxu0 0.0
    %154 = vmatprep.subr.mxu0 0.0
    %155 = vmatpush2.msra.mxu0 0.0
    %156 = vmatprep.subr.mxu0 0.0
    %157 = vmatpush2.msra.mxu0 0.0
    %158 = vmatprep.subr.mxu0 0.0
    %159 = vmatpush2.msra.mxu0 0.0
    %160 = vmatprep.mubr.f32.mxu0 0.0
    %161 = vmatmul.mubr.f32.gmra.mxu0 %v94
    %v162 = vpop.f32.mrf.mxu0
    %v163 = vadd.f32 %v91, %v162
    %v164 = vpop.f32.mrf.mxu0
    %165 = vdwg.mxu0
    %v167 = vsel %vm92, %v76, 0
    %v170 = vsel %vm92, %v77, 0
    %172 = vmatprep.subr.mxu0 0.0
    %173 = vmatpush1.msra.mxu0 0.0
    %174 = vmatprep.subr.mxu0 0.0
    %175 = vmatpush1.msra.mxu0 0.0
    %176 = vmatprep.subr.mxu0 0.0
    %177 = vmatpush1.msra.mxu0 0.0
    %178 = vmatprep.subr.mxu0 0.0
    %179 = vmatpush1.msra.mxu0 0.0
    %180 = vmatprep.subr.mxu0 0.0
    %181 = vmatpush1.msra.mxu0 0.0
    %182 = vmatprep.subr.mxu0 0.0
    %183 = vmatpush1.msra.mxu0 0.0
    %184 = vmatprep.subr.mxu0 0.0
    %185 = vmatpush1.msra.mxu0 0.0
    %186 = vmatprep.subr.mxu0 0.0
    %187 = vmatpush1.msra.mxu0 0.0
    %188 = vmatprep.subr.mxu0 0.0
    %189 = vmatpush1.msra.mxu0 0.0
    %190 = vmatprep.subr.mxu0 0.0
    %191 = vmatpush1.msra.mxu0 0.0
    %192 = vmatprep.subr.mxu0 0.0
    %193 = vmatpush1.msra.mxu0 0.0
    %194 = vmatprep.subr.mxu0 0.0
    %195 = vmatpush1.msra.mxu0 0.0
    %196 = vmatprep.subr.mxu0 0.0
    %197 = vmatpush1.msra.mxu0 %v85
    %198 = vmatprep.subr.mxu0 0.0
    %199 = vmatpush1.msra.mxu0 %v84
    %200 = vmatprep.subr.mxu0 0.0
    %201 = vmatpush1.msra.mxu0 %v83
    %202 = vmatprep.subr.mxu0 0.0
    %203 = vmatpush1.msra.mxu0 %v82
    %204 = vmatprep.subr.mxu0 0.0
    %205 = vmatpush2.msra.mxu0 0.0
    %206 = vmatprep.subr.mxu0 0.0
    %207 = vmatpush2.msra.mxu0 0.0
    %208 = vmatprep.subr.mxu0 0.0
    %209 = vmatpush2.msra.mxu0 0.0
    %210 = vmatprep.subr.mxu0 0.0
    %211 = vmatpush2.msra.mxu0 0.0
    %212 = vmatprep.subr.mxu0 0.0
    %213 = vmatpush2.msra.mxu0 0.0
    %214 = vmatprep.subr.mxu0 0.0
    %215 = vmatpush2.msra.mxu0 0.0
    %216 = vmatprep.subr.mxu0 0.0
    %217 = vmatpush2.msra.mxu0 0.0
    %218 = vmatprep.subr.mxu0 0.0
    %219 = vmatpush2.msra.mxu0 0.0
    %220 = vmatprep.subr.mxu0 0.0
    %221 = vmatpush2.msra.mxu0 0.0
    %222 = vmatprep.subr.mxu0 0.0
    %223 = vmatpush2.msra.mxu0 0.0
    %224 = vmatprep.subr.mxu0 0.0
    %225 = vmatpush2.msra.mxu0 0.0
    %226 = vmatprep.subr.mxu0 0.0
    %227 = vmatpush2.msra.mxu0 0.0
    %228 = vmatprep.subr.mxu0 0.0
    %229 = vmatpush2.msra.mxu0 0.0
    %230 = vmatprep.subr.mxu0 0.0
    %231 = vmatpush2.msra.mxu0 0.0
    %232 = vmatprep.subr.mxu0 0.0
    %233 = vmatpush2.msra.mxu0 0.0
    %234 = vmatprep.subr.mxu0 0.0
    %235 = vmatpush2.msra.mxu0 0.0
    %236 = vmatprep.mubr.f32.mxu0 0.0
    %237 = vmatmul.mubr.f32.gmra.mxu0 %v167
    %v238 = vpop.f32.mrf.mxu0
    %v239 = vadd.f32 0.0, %v238
    %v240 = vpop.f32.mrf.mxu0
    %241 = vmatprep.mubr.f32.mxu0 0.0
    %242 = vmatmul.mubr.f32.gmra.mxu0 %v170
    %v243 = vpop.f32.mrf.mxu0
    %v244 = vadd.f32 0.0, %v243
    %v245 = vpop.f32.mrf.mxu0
    %246 = vdwg.mxu0
    %v249 = vunpack.c.l.s4 1966171168
    %v250 = vunpack.c.0.s8 %v249
    %v251 = vlaneseq
    %v252 = vshrl.u32 %v251, 7
    %v253 = vsub.s32 %v250, %v252
    %v254 = vrot.slane %v163, %v253
    %v255 = vcombine.high %v254, %v254
    %v257 = vunpack.c.l.s4 1966171168
    %v258 = vunpack.c.0.s8 %v257
    %v259 = vlaneseq
    %v260 = vshrl.u32 %v259, 7
    %v261 = vsub.s32 %v258, %v260
    %v262 = vrot.slane %v254, %v261
    %v264 = vunpack.c.l.s4 1966171168
    %v265 = vunpack.c.0.s8 %v264
    %v266 = vlaneseq
    %v267 = vshrl.u32 %v266, 7
    %v268 = vsub.s32 %v265, %v267
    %v269 = vrot.slane %v255, %v268
    %v270 = vlaneseq
    %v271 = vshrl.u32 %v270, 7
    %v272 = vsub.s32 0, %v271
    %v273 = vrot.slane %v262, %v272
    %v274 = vlaneseq
    %v275 = vshrl.u32 %v274, 7
    %v276 = vsub.s32 0, %v275
    %v277 = vrot.slane %v269, %v276
    %v280 = vadd.f32 %v239, %v273
    %v281 = vadd.f32 %v244, %v277
    %v282 = vtanh.pop %v280
    %v283 = vtanh.pop %v281
    %v284 = vlaneseq
    %v285 = vshrl.u32 %v284, 7
    %v286 = vsub.s32 0, %v285
    %v287 = vrot.slane %v87, %v286
    %v288 = vmul.f32 %v282, %v287
    %v289 = vmul.f32 %v283, %v287
    %v290 = vsel %vm92, %v288, 0.0
    %291 = vadd.xlane.f32.xlu0 %v290
    %v292 = vpop.xlane.xlu0 %291
    %v293 = vsel %vm92, %v289, 0.0
    %294 = vadd.xlane.f32.xlu0 %v293
    %v295 = vpop.xlane.xlu0 %294
    %v298 = vlaneseq
    %v299 = vand.u32 %v298, 127
    %v300 = vlaneseq
    %v301 = vshrl.u32 %v300, 7
    %v302 = vsub.s32 %v299, %v301
    %v303 = vrot.slane %v292, %v302
    %v304 = vlaneseq
    %v305 = vshrl.u32 %v304, 7
    %v306 = vsub.s32 %v299, %v305
    %v307 = vrot.slane %v295, %v306
    %vm308 = vcmask 1041409
    %v309 = vsel %vm308, %v307, %v303
    %vm311 = vcmask 58368
    %v312 = vsel %vm311, %v309, -inf
    %313 = vmax.xlane.f32.xlu0 %v312
    %v314 = vpop.xlane.xlu0 %313
    %v316 = vlaneseq
    %v317 = vshrl.u32 %v316, 7
    %v318 = vsub.s32 0, %v317
    %v319 = vrot.slane %v314, %v318
    %v320 = vlaneseq
    %v321 = vshrl.u32 %v320, 7
    %v322 = vsub.s32 1, %v321
    %v323 = vrot.slane %v314, %v322
    %v326 = vsub.f32 %v292, %v319
    %v327 = vsub.f32 %v295, %v323
    %v328 = vmul.f32 %v326, 1.442695
    %v329 = vpow.pop %v328
    %v330 = vmul.f32 %v327, 1.442695
    %v331 = vpow.pop %v330
    %334 = vset.pattern.permute.xlu0 0
    %335 = vperm.xlu0 %334, %v329
    %v336 = vpop.permute.xlu0 %335
    %337 = vset.pattern.permute.xlu0 0
    %338 = vperm.xlu0 %337, %v331
    %v339 = vpop.permute.xlu0 %338
    %v340 = vlaneseq
    %v341 = vshrl.u32 %v340, 7
    %v342 = vsub.s32 %v299, %v341
    %v343 = vrot.slane %v336, %v342
    %v344 = vlaneseq
    %v345 = vshrl.u32 %v344, 7
    %v346 = vsub.s32 %v299, %v345
    %v347 = vrot.slane %v339, %v346
    %v348 = vsel %vm308, %v347, %v343
    %v350 = vsel %vm311, %v348, 0.0
    %351 = vadd.xlane.f32.xlu0 %v350
    %v352 = vpop.xlane.xlu0 %351
    %v354 = vlaneseq
    %v355 = vshrl.u32 %v354, 7
    %v356 = vsub.s32 0, %v355
    %v357 = vrot.slane %v352, %v356
    %v358 = vlaneseq
    %v359 = vshrl.u32 %v358, 7
    %v360 = vsub.s32 1, %v359
    %v361 = vrot.slane %v352, %v360
    %v364 = vrcp.pop %v357
    %v365 = vmul.f32 %v329, %v364
    %v366 = vrcp.pop %v361
    %v367 = vmul.f32 %v331, %v366
    %370 = vset.pattern.permute.xlu0 0
    %371 = vperm.xlu0 %370, %v365
    %v372 = vpop.permute.xlu0 %371
    %373 = vset.pattern.permute.xlu0 0
    %374 = vperm.xlu0 %373, %v367
    %v375 = vpop.permute.xlu0 %374
    %v376 = vlaneseq
    %v377 = vshrl.u32 %v376, 7
    %v378 = vsub.s32 %v299, %v377
    %v379 = vrot.slane %v372, %v378
    %v380 = vlaneseq
    %v381 = vshrl.u32 %v380, 7
    %v382 = vsub.s32 %v299, %v381
    %v383 = vrot.slane %v375, %v382
    %v384 = vsel %vm308, %v383, %v379
    %386 = vst.msk [vmem:[#allocation8] sm:$0x3] %vm311, %v384
    %v389 = vmul.f32 %v372, %v76
    %v390 = vmul.f32 %v375, %v77
    %v391 = vsel %vm92, %v389, 0.0
    %v392 = vrot.slane %v391, 4
    %v393 = vadd.f32 %v391, %v392
    %v394 = vrot.slane %v393, 2
    %v395 = vadd.f32 %v393, %v394
    %v396 = vrot.slane %v395, 1
    %v397 = vadd.f32 %v395, %v396
    %v398 = vsel %vm92, %v390, 0.0
    %v399 = vrot.slane %v398, 4
    %v400 = vadd.f32 %v398, %v399
    %v401 = vrot.slane %v400, 2
    %v402 = vadd.f32 %v400, %v401
    %v403 = vrot.slane %v402, 1
    %v404 = vadd.f32 %v402, %v403
    %v405 = vld [vmem:[#allocation6 + $0x80] sm:$0xff]
    %v406 = vld [vmem:[#allocation6 + $0x88] sm:$0xff]
    %v407 = vld [vmem:[#allocation6 + $0x90] sm:$0xff]
    %v408 = vld [vmem:[#allocation6 + $0x98] sm:$0xff]
    %v409 = vld [vmem:[#allocation6 + $0xa0] sm:$0xff]
    %v410 = vld [vmem:[#allocation6 + $0xa8] sm:$0xff]
    %v411 = vld [vmem:[#allocation6 + $0xb0] sm:$0xff]
    %v412 = vld [vmem:[#allocation6 + $0xb8] sm:$0xff]
    %v415 = vsel %vm308, %v404, %v397
    %418 = vrot.lane.b32.xlu0 %v52, 32
    %v419 = vpop.permute.xlu0 %418
    %v421 = vsel %vm92, %v415, %v419
    %vm422 = vcmask 523264
    %v424 = vsel %vm422, %v421, 0
    %426 = vmatprep.subr.mxu0 0.0
    %427 = vmatpush1.msra.mxu0 0.0
    %428 = vmatprep.subr.mxu0 0.0
    %429 = vmatpush1.msra.mxu0 0.0
    %430 = vmatprep.subr.mxu0 0.0
    %431 = vmatpush1.msra.mxu0 0.0
    %432 = vmatprep.subr.mxu0 0.0
    %433 = vmatpush1.msra.mxu0 0.0
    %434 = vmatprep.subr.mxu0 0.0
    %435 = vmatpush1.msra.mxu0 0.0
    %436 = vmatprep.subr.mxu0 0.0
    %437 = vmatpush1.msra.mxu0 0.0
    %438 = vmatprep.subr.mxu0 0.0
    %439 = vmatpush1.msra.mxu0 0.0
    %440 = vmatprep.subr.mxu0 0.0
    %441 = vmatpush1.msra.mxu0 0.0
    %442 = vmatprep.subr.mxu0 0.0
    %443 = vmatpush1.msra.mxu0 %v412
    %444 = vmatprep.subr.mxu0 0.0
    %445 = vmatpush1.msra.mxu0 %v411
    %446 = vmatprep.subr.mxu0 0.0
    %447 = vmatpush1.msra.mxu0 %v410
    %448 = vmatprep.subr.mxu0 0.0
    %449 = vmatpush1.msra.mxu0 %v409
    %450 = vmatprep.subr.mxu0 0.0
    %451 = vmatpush1.msra.mxu0 %v408
    %452 = vmatprep.subr.mxu0 0.0
    %453 = vmatpush1.msra.mxu0 %v407
    %454 = vmatprep.subr.mxu0 0.0
    %455 = vmatpush1.msra.mxu0 %v406
    %456 = vmatprep.subr.mxu0 0.0
    %457 = vmatpush1.msra.mxu0 %v405
    %458 = vmatprep.subr.mxu0 0.0
    %459 = vmatpush2.msra.mxu0 0.0
    %460 = vmatprep.subr.mxu0 0.0
    %461 = vmatpush2.msra.mxu0 0.0
    %462 = vmatprep.subr.mxu0 0.0
    %463 = vmatpush2.msra.mxu0 0.0
    %464 = vmatprep.subr.mxu0 0.0
    %465 = vmatpush2.msra.mxu0 0.0
    %466 = vmatprep.subr.mxu0 0.0
    %467 = vmatpush2.msra.mxu0 0.0
    %468 = vmatprep.subr.mxu0 0.0
    %469 = vmatpush2.msra.mxu0 0.0
    %470 = vmatprep.subr.mxu0 0.0
    %471 = vmatpush2.msra.mxu0 0.0
    %472 = vmatprep.subr.mxu0 0.0
    %473 = vmatpush2.msra.mxu0 0.0
    %474 = vmatprep.subr.mxu0 0.0
    %475 = vmatpush2.msra.mxu0 0.0
    %476 = vmatprep.subr.mxu0 0.0
    %477 = vmatpush2.msra.mxu0 0.0
    %478 = vmatprep.subr.mxu0 0.0
    %479 = vmatpush2.msra.mxu0 0.0
    %480 = vmatprep.subr.mxu0 0.0
    %481 = vmatpush2.msra.mxu0 0.0
    %482 = vmatprep.subr.mxu0 0.0
    %483 = vmatpush2.msra.mxu0 0.0
    %484 = vmatprep.subr.mxu0 0.0
    %485 = vmatpush2.msra.mxu0 0.0
    %486 = vmatprep.subr.mxu0 0.0
    %487 = vmatpush2.msra.mxu0 0.0
    %488 = vmatprep.subr.mxu0 0.0
    %489 = vmatpush2.msra.mxu0 0.0
    %490 = vmatprep.mubr.f32.mxu0 0.0
    %491 = vmatmul.mubr.f32.gmra.mxu0 %v424
    %v492 = vpop.f32.mrf.mxu0
    %v493 = vadd.f32 %v65, %v492
    %v494 = vpop.f32.mrf.mxu0
    %495 = vdwg.mxu0
    %v496 = vld [vmem:[#allocation6 + $0x140] sm:$0x1]
    %v497 = vlaneseq
    %v498 = vshrl.u32 %v497, 7
    %v499 = vsub.s32 0, %v498
    %v500 = vrot.slane %v496, %v499
    %v501 = vadd.f32 %v493, %v500
    %v502 = vxor.u32 %v501, 2147483648
    %v503 = vmul.f32 %v502, 1.442695
    %v504 = vpow.pop %v503
    %v505 = vadd.f32 %v504, 1.0
    %v506 = vrcp.pop %v505
    %v507 = vmul.f32 1.0, %v506
    %509 = vrot.lane.b32.xlu0 %v501, 32
    %v510 = vpop.permute.xlu0 %509
    %v512 = vmul.f32 %v507, %v510
    %514 = vrot.lane.b32.xlu0 %v512, 64
    %v515 = vpop.permute.xlu0 %514
    %v517 = vadd.f32 %v501, %v515
    %v518 = vtanh.pop %v517
    %v519 = vsub.f32 1.0, %v507
    %521 = vrot.lane.b32.xlu0 %v518, 96
    %v522 = vpop.permute.xlu0 %521
    %v524 = vmul.f32 %v519, %v522
    %v525 = vmul.f32 %v507, %v419
    %v526 = vadd.f32 %v524, %v525
    %v527 = vld [vmem:[#allocation6 + $0xc0] sm:$0xff]
    %v528 = vld [vmem:[#allocation6 + $0xc8] sm:$0xff]
    %v529 = vld [vmem:[#allocation6 + $0xd0] sm:$0xff]
    %v530 = vld [vmem:[#allocation6 + $0xd8] sm:$0xff]
    %v531 = vld [vmem:[#allocation6 + $0xe0] sm:$0xff]
    %v532 = vld [vmem:[#allocation6 + $0xe8] sm:$0xff]
    %v533 = vld [vmem:[#allocation6 + $0xf0] sm:$0xff]
    %v534 = vld [vmem:[#allocation6 + $0xf8] sm:$0xff]
    %536 = vrot.lane.b32.xlu0 %v526, 96
    %v537 = vpop.permute.xlu0 %536
    %539 = vrot.lane.b32.xlu0 %v54, 32
    %v540 = vpop.permute.xlu0 %539
    %v542 = vsel %vm92, %v537, %v540
    %v543 = vld [vmem:[#allocation6 + $0x141] sm:$0x1]
    %v544 = vlaneseq
    %v545 = vshrl.u32 %v544, 7
    %v546 = vsub.s32 0, %v545
    %v547 = vrot.slane %v543, %v546
    %v549 = vsel %vm422, %v542, 0
    %551 = vmatprep.subr.mxu0 0.0
    %552 = vmatpush1.msra.mxu0 0.0
    %553 = vmatprep.subr.mxu0 0.0
    %554 = vmatpush1.msra.mxu0 0.0
    %555 = vmatprep.subr.mxu0 0.0
    %556 = vmatpush1.msra.mxu0 0.0
    %557 = vmatprep.subr.mxu0 0.0
    %558 = vmatpush1.msra.mxu0 0.0
    %559 = vmatprep.subr.mxu0 0.0
    %560 = vmatpush1.msra.mxu0 0.0
    %561 = vmatprep.subr.mxu0 0.0
    %562 = vmatpush1.msra.mxu0 0.0
    %563 = vmatprep.subr.mxu0 0.0
    %564 = vmatpush1.msra.mxu0 0.0
    %565 = vmatprep.subr.mxu0 0.0
    %566 = vmatpush1.msra.mxu0 0.0
    %567 = vmatprep.subr.mxu0 0.0
    %568 = vmatpush1.msra.mxu0 %v534
    %569 = vmatprep.subr.mxu0 0.0
    %570 = vmatpush1.msra.mxu0 %v533
    %571 = vmatprep.subr.mxu0 0.0
    %572 = vmatpush1.msra.mxu0 %v532
    %573 = vmatprep.subr.mxu0 0.0
    %574 = vmatpush1.msra.mxu0 %v531
    %575 = vmatprep.subr.mxu0 0.0
    %576 = vmatpush1.msra.mxu0 %v530
    %577 = vmatprep.subr.mxu0 0.0
    %578 = vmatpush1.msra.mxu0 %v529
    %579 = vmatprep.subr.mxu0 0.0
    %580 = vmatpush1.msra.mxu0 %v528
    %581 = vmatprep.subr.mxu0 0.0
    %582 = vmatpush1.msra.mxu0 %v527
    %583 = vmatprep.subr.mxu0 0.0
    %584 = vmatpush2.msra.mxu0 0.0
    %585 = vmatprep.subr.mxu0 0.0
    %586 = vmatpush2.msra.mxu0 0.0
    %587 = vmatprep.subr.mxu0 0.0
    %588 = vmatpush2.msra.mxu0 0.0
    %589 = vmatprep.subr.mxu0 0.0
    %590 = vmatpush2.msra.mxu0 0.0
    %591 = vmatprep.subr.mxu0 0.0
    %592 = vmatpush2.msra.mxu0 0.0
    %593 = vmatprep.subr.mxu0 0.0
    %594 = vmatpush2.msra.mxu0 0.0
    %595 = vmatprep.subr.mxu0 0.0
    %596 = vmatpush2.msra.mxu0 0.0
    %597 = vmatprep.subr.mxu0 0.0
    %598 = vmatpush2.msra.mxu0 0.0
    %599 = vmatprep.subr.mxu0 0.0
    %600 = vmatpush2.msra.mxu0 0.0
    %601 = vmatprep.subr.mxu0 0.0
    %602 = vmatpush2.msra.mxu0 0.0
    %603 = vmatprep.subr.mxu0 0.0
    %604 = vmatpush2.msra.mxu0 0.0
    %605 = vmatprep.subr.mxu0 0.0
    %606 = vmatpush2.msra.mxu0 0.0
    %607 = vmatprep.subr.mxu0 0.0
    %608 = vmatpush2.msra.mxu0 0.0
    %609 = vmatprep.subr.mxu0 0.0
    %610 = vmatpush2.msra.mxu0 0.0
    %611 = vmatprep.subr.mxu0 0.0
    %612 = vmatpush2.msra.mxu0 0.0
    %613 = vmatprep.subr.mxu0 0.0
    %614 = vmatpush2.msra.mxu0 0.0
    %615 = vmatprep.mubr.f32.mxu0 0.0
    %616 = vmatmul.mubr.f32.gmra.mxu0 %v549
    %v617 = vpop.f32.mrf.mxu0
    %v618 = vadd.f32 %v547, %v617
    %v619 = vpop.f32.mrf.mxu0
    %620 = vdwg.mxu0
    %v621 = vxor.u32 %v618, 2147483648
    %v622 = vmul.f32 %v621, 1.442695
    %v623 = vpow.pop %v622
    %v624 = vadd.f32 %v623, 1.0
    %v625 = vrcp.pop %v624
    %v626 = vmul.f32 1.0, %v625
    %628 = vrot.lane.b32.xlu0 %v618, 32
    %v629 = vpop.permute.xlu0 %628
    %v631 = vmul.f32 %v626, %v629
    %633 = vrot.lane.b32.xlu0 %v631, 64
    %v634 = vpop.permute.xlu0 %633
    %v636 = vadd.f32 %v618, %v634
    %v637 = vtanh.pop %v636
    %v638 = vsub.f32 1.0, %v626
    %640 = vrot.lane.b32.xlu0 %v637, 96
    %v641 = vpop.permute.xlu0 %640
    %v643 = vmul.f32 %v638, %v641
    %v644 = vmul.f32 %v626, %v540
    %v645 = vadd.f32 %v643, %v644
    %v646 = vld [vmem:[#allocation6 + $0x100] sm:$0xff]
    %v647 = vld [vmem:[#allocation6 + $0x108] sm:$0xff]
    %v648 = vld [vmem:[#allocation6 + $0x110] sm:$0xff]
    %v649 = vld [vmem:[#allocation6 + $0x118] sm:$0xff]
    %v650 = vld [vmem:[#allocation6 + $0x120] sm:$0xff]
    %v651 = vld [vmem:[#allocation6 + $0x128] sm:$0xff]
    %v652 = vld [vmem:[#allocation6 + $0x130] sm:$0xff]
    %v653 = vld [vmem:[#allocation6 + $0x138] sm:$0xff]
    %655 = vrot.lane.b32.xlu0 %v645, 96
    %v656 = vpop.permute.xlu0 %655
    %658 = vrot.lane.b32.xlu0 %v415, 32
    %v659 = vpop.permute.xlu0 %658
    %v661 = vsel %vm92, %v656, %v659
    %v663 = vsel %vm422, %v661, 0
    %665 = vmatprep.subr.mxu0 0.0
    %666 = vmatpush1.msra.mxu0 0.0
    %667 = vmatprep.subr.mxu0 0.0
    %668 = vmatpush1.msra.mxu0 0.0
    %669 = vmatprep.subr.mxu0 0.0
    %670 = vmatpush1.msra.mxu0 0.0
    %671 = vmatprep.subr.mxu0 0.0
    %672 = vmatpush1.msra.mxu0 0.0
    %673 = vmatprep.subr.mxu0 0.0
    %674 = vmatpush1.msra.mxu0 0.0
    %675 = vmatprep.subr.mxu0 0.0
    %676 = vmatpush1.msra.mxu0 0.0
    %677 = vmatprep.subr.mxu0 0.0
    %678 = vmatpush1.msra.mxu0 0.0
    %679 = vmatprep.subr.mxu0 0.0
    %680 = vmatpush1.msra.mxu0 0.0
    %681 = vmatprep.subr.mxu0 0.0
    %682 = vmatpush1.msra.mxu0 %v653
    %683 = vmatprep.subr.mxu0 0.0
    %684 = vmatpush1.msra.mxu0 %v652
    %685 = vmatprep.subr.mxu0 0.0
    %686 = vmatpush1.msra.mxu0 %v651
    %687 = vmatprep.subr.mxu0 0.0
    %688 = vmatpush1.msra.mxu0 %v650
    %689 = vmatprep.subr.mxu0 0.0
    %690 = vmatpush1.msra.mxu0 %v649
    %691 = vmatprep.subr.mxu0 0.0
    %692 = vmatpush1.msra.mxu0 %v648
    %693 = vmatprep.subr.mxu0 0.0
    %694 = vmatpush1.msra.mxu0 %v647
    %695 = vmatprep.subr.mxu0 0.0
    %696 = vmatpush1.msra.mxu0 %v646
    %697 = vmatprep.subr.mxu0 0.0
    %698 = vmatpush2.msra.mxu0 0.0
    %699 = vmatprep.subr.mxu0 0.0
    %700 = vmatpush2.msra.mxu0 0.0
    %701 = vmatprep.subr.mxu0 0.0
    %702 = vmatpush2.msra.mxu0 0.0
    %703 = vmatprep.subr.mxu0 0.0
    %704 = vmatpush2.msra.mxu0 0.0
    %705 = vmatprep.subr.mxu0 0.0
    %706 = vmatpush2.msra.mxu0 0.0
    %707 = vmatprep.subr.mxu0 0.0
    %708 = vmatpush2.msra.mxu0 0.0
    %709 = vmatprep.subr.mxu0 0.0
    %710 = vmatpush2.msra.mxu0 0.0
    %711 = vmatprep.subr.mxu0 0.0
    %712 = vmatpush2.msra.mxu0 0.0
    %713 = vmatprep.subr.mxu0 0.0
    %714 = vmatpush2.msra.mxu0 0.0
    %715 = vmatprep.subr.mxu0 0.0
    %716 = vmatpush2.msra.mxu0 0.0
    %717 = vmatprep.subr.mxu0 0.0
    %718 = vmatpush2.msra.mxu0 0.0
    %719 = vmatprep.subr.mxu0 0.0
    %720 = vmatpush2.msra.mxu0 0.0
    %721 = vmatprep.subr.mxu0 0.0
    %722 = vmatpush2.msra.mxu0 0.0
    %723 = vmatprep.subr.mxu0 0.0
    %724 = vmatpush2.msra.mxu0 0.0
    %725 = vmatprep.subr.mxu0 0.0
    %726 = vmatpush2.msra.mxu0 0.0
    %727 = vmatprep.subr.mxu0 0.0
    %728 = vmatpush2.msra.mxu0 0.0
    %729 = vmatprep.mubr.f32.mxu0 0.0
    %730 = vmatmul.mubr.f32.gmra.mxu0 %v663
    %v731 = vpop.f32.mrf.mxu0
    %v732 = vadd.f32 %v75, %v731
    %v733 = vpop.f32.mrf.mxu0
    %734 = vdwg.mxu0
    %v735 = vld [vmem:[#allocation6 + $0x142] sm:$0x1]
    %v736 = vlaneseq
    %v737 = vshrl.u32 %v736, 7
    %v738 = vsub.s32 0, %v737
    %v739 = vrot.slane %v735, %v738
    %v740 = vadd.f32 %v732, %v739
    %741 = vst [vmem:[#allocation7] sm:$0x3] %v740
    %vm742 = vcmask 254976
    %743 = vst.msk [vmem:[%s6] sm:$0x3] %vm742, %v537
    %s744 = scalar_lea.vmem %s6, 2
    %745 = vst.msk [vmem:[%s744] sm:$0x3] %vm742, %v656
    // Predicated region
    $region30: #{attention_decoder_forward.1} parent=1 // pred_check
      _
    $region31: #{attention_decoder_forward.1} parent=1 // pred_check_branch
      %747 = sbr.rel (0) target = $region33
    $region32: #{attention_decoder_forward.1} parent=1 // pred_region
      %s749 = ssub.s32 32, 32
      %750 = vsyncadd [#allocation4], %s749
      %s752 = sshll.u32 [#allocation7], 4
      %s753 = int_to_ptr.vmem [resolvable:$true] %s752
      %755 = dma.vmem_to_hbm [thread:$0]  %s753, 32, %s5, [#allocation4]
    $region33: #{attention_decoder_forward.1} parent=1 // pred_fallthru
      _
    // Predicated region
    $region34: #{attention_decoder_forward.1} parent=1 // pred_check
      _
    $region35: #{attention_decoder_forward.1} parent=1 // pred_check_branch
      %757 = sbr.rel (0) target = $region37
    $region36: #{attention_decoder_forward.1} parent=1 // pred_region
      _
    $region37: #{attention_decoder_forward.1} parent=1 // pred_fallthru
      _
    // Predicated region
    $region38: #{attention_decoder_forward.1} parent=1 // pred_check
      _
    $region39: #{attention_decoder_forward.1} parent=1 // pred_check_branch
      %759 = sbr.rel (0) target = $region41
    $region40: #{attention_decoder_forward.1} parent=1 // pred_region
      %s761 = ssub.s32 32, 32
      %762 = vsyncadd [#allocation9], %s761
      %s764 = sshll.u32 [#allocation8], 4
      %s765 = int_to_ptr.vmem [resolvable:$true] %s764
      %767 = dma.vmem_to_hbm [thread:$0]  %s765, 32, %s7, [#allocation9]
    $region41: #{attention_decoder_forward.1} parent=1 // pred_fallthru
      _
    // Predicated region
    $region42: #{attention_decoder_forward.1} parent=1 // pred_check
      _
    $region43: #{attention_decoder_forward.1} parent=1 // pred_check_branch
      %769 = sbr.rel (0) target = $region45
    $region44: #{attention_decoder_forward.1} parent=1 // pred_region
      %770 = dma.done [#allocation4], 32
    $region45: #{attention_decoder_forward.1} parent=1 // pred_fallthru
      _
    // Predicated region
    $region46: #{attention_decoder_forward.1} parent=1 // pred_check
      _
    $region47: #{attention_decoder_forward.1} parent=1 // pred_check_branch
      %772 = sbr.rel (0) target = $region49
    $region48: #{attention_decoder_forward.1} parent=1 // pred_region
      _
    $region49: #{attention_decoder_forward.1} parent=1 // pred_fallthru
      _
    // Predicated region
    $region50: #{attention_decoder_forward.1} parent=1 // pred_check
      _
    $region51: #{attention_decoder_forward.1} parent=1 // pred_check_branch
      %774 = sbr.rel (0) target = $region53
    $region52: #{attention_decoder_forward.1} parent=1 // pred_region
      %775 = dma.done [#allocation9], 32
    $region53: #{attention_decoder_forward.1} parent=1 // pred_fallthru
      _
    %776 = vsyncpa [#allocation3], 1
    %777 = vsyncpa [#allocation4], 1
    %778 = vsyncpa [#allocation9], 1
    %779 = vsyncpa [#allocation5], 1

</llo_original>
